<compile_context>
chip_gen: v6e
topology: v6e:2x2x1
jax: 0.10.0
libtpu: 0.0.40
codegen_flags: <defaults>
</compile_context>

<pallas_src>
import math
import jax
import jax.numpy as jnp
from jax.experimental import pallas as pl
from jax.experimental.pallas import tpu as pltpu

# ------------------------------- config -------------------------------------
Y_DIM = 8      # number of GMM components (also width of the one-hot input)
Z_DIM = 64     # latent dim -> fused output is 2*Z_DIM = 128 lanes (lane-dense)


# ----------------------------- Pallas kernel --------------------------------
def _prior_fc_kernel(onehot_ref, w1_ref, b1_ref, w2_ref, b2_ref, out_ref):
    # onehot: (Y, Y) bf16, w1: (Y, 2Z) bf16, b1: (1, 2Z) f32,
    # w2: (2Z, 2Z) bf16 block-diagonal, b2: (1, 2Z) f32, out: (Y, 2Z) f32.
    oh = onehot_ref[...]
    h = jnp.dot(oh, w1_ref[...], preferred_element_type=jnp.float32) + b1_ref[...]
    h = jnp.maximum(h, 0.0)                                   # DenseBlock ReLU
    out_ref[...] = (
        jnp.dot(h.astype(jnp.bfloat16), w2_ref[...],
                preferred_element_type=jnp.float32) + b2_ref[...]
    )


def prior_fc_pallas(onehot_y, w1_cat, b1_cat, w2_blk, b2_cat):
    """Fused fc-prior: returns the (Y_DIM, 2*Z_DIM) slab [y_mus | y_logvars]."""
    y_dim = onehot_y.shape[0]
    two_z = w1_cat.shape[1]
    vmem = lambda: pl.BlockSpec(memory_space=pltpu.MemorySpace.VMEM)
    return pl.pallas_call(
        _prior_fc_kernel,
        out_shape=jax.ShapeDtypeStruct((y_dim, two_z), jnp.float32),
        in_specs=[vmem(), vmem(), vmem(), vmem(), vmem()],
        out_specs=vmem(),
    )(onehot_y, w1_cat, b1_cat, w2_blk, b2_cat)


# ----------------------------- parameter setup ------------------------------
def _linear_params(key, fan_in, fan_out):
    """Deterministic analogue of torch.nn.Linear default init; weight as (in, out)."""
    kw, kb = jax.random.split(key)
    bound = 1.0 / math.sqrt(fan_in)
    w = jax.random.uniform(kw, (fan_in, fan_out), jnp.float32, -bound, bound)
    b = jax.random.uniform(kb, (1, fan_out), jnp.float32, -bound, bound)
    return w, b


def init_prior_fc_params(key):
    ks = jax.random.split(key, 4)
    mu_head = (*_linear_params(ks[0], Y_DIM, Z_DIM), *_linear_params(ks[1], Z_DIM, Z_DIM))
    lv_head = (*_linear_params(ks[2], Y_DIM, Z_DIM), *_linear_params(ks[3], Z_DIM, Z_DIM))
    return mu_head, lv_head   # each: (w1, b1, w2, b2)


def pack_fc_params(mu_head, lv_head):
    """Fuse the two heads into one lane-dense weight set (bf16 matmul operands)."""
    w_mu1, b_mu1, w_mu2, b_mu2 = mu_head
    w_lv1, b_lv1, w_lv2, b_lv2 = lv_head
    w1_cat = jnp.concatenate([w_mu1, w_lv1], axis=1).astype(jnp.bfloat16)   # (Y, 2Z)
    b1_cat = jnp.concatenate([b_mu1, b_lv1], axis=1)                        # (1, 2Z) f32
    zero = jnp.zeros((Z_DIM, Z_DIM), jnp.float32)
    w2_blk = jnp.concatenate(
        [jnp.concatenate([w_mu2, zero], axis=1),
         jnp.concatenate([zero, w_lv2], axis=1)], axis=0).astype(jnp.bfloat16)  # (2Z, 2Z)
    b2_cat = jnp.concatenate([b_mu2, b_lv2], axis=1)                        # (1, 2Z) f32
    return w1_cat, b1_cat, w2_blk, b2_cat


def init_prior_tensor_params(key):
    """prior_generator='tensor' parameters, as in the PyTorch module."""
    k1, k2 = jax.random.split(key)
    s = math.sqrt(6.0 / (Y_DIM + Z_DIM))
    mu_prior = (jax.random.uniform(k1, (Y_DIM, Z_DIM), jnp.float32) - 0.5) * 2.0 * s
    logvar_prior = (jax.random.uniform(k2, (Y_DIM, Z_DIM), jnp.float32) - 0.5) * 2.0 * s
    return mu_prior, logvar_prior


# ------------------------------- full forward -------------------------------
def prior_forward(x, *, prior_generator="fc", packed_fc=None, tensor_params=None):
    """Mirrors Prior.forward(x) -> (y_mus, y_logvars) for GMM_model_name='VVI'."""
    del x  # x only supplies a dtype for onehot_y in the original; values unused
    if prior_generator.startswith("tensor"):
        mu_prior, logvar_prior = tensor_params
        return mu_prior, logvar_prior
    # fc path (module default)
    onehot_y = jnp.eye(Y_DIM, dtype=jnp.bfloat16)             # self.onehot_y
    out = prior_fc_pallas(onehot_y, *packed_fc)               # (Y, 2Z) lane-dense
    return out[:, :Z_DIM], out[:, Z_DIM:]
    # TODO(synk): GMM_model_name='EEE' (logvars=None) and the onehot_idx branch of
    # get_prior_mu_logvar are not exercised by forward() and are not implemented.


# -------------------------- pure-JAX reference check ------------------------
def _reference_fc(mu_head, lv_head):
    onehot = jnp.eye(Y_DIM, dtype=jnp.float32)

    def head(w1, b1, w2, b2):
        h = jnp.maximum(onehot @ w1 + b1, 0.0)
        return h @ w2 + b2

    return head(*mu_head), head(*lv_head)


if __name__ == "__main__":
    key = jax.random.PRNGKey(0)
    k_fc, k_tensor, k_x = jax.random.split(key, 3)

    # -- fc prior generator (default config): runs the Pallas kernel ---------
    mu_head, lv_head = init_prior_fc_params(k_fc)
    packed = pack_fc_params(mu_head, lv_head)
    x_dummy = jax.random.normal(k_x, (2, Y_DIM), jnp.float32)   # forward ignores values

    y_mus, y_logvars = prior_forward(x_dummy, prior_generator="fc", packed_fc=packed)
    jax.block_until_ready((y_mus, y_logvars))

    mus_ref, lvs_ref = _reference_fc(mu_head, lv_head)
    assert y_mus.shape == (Y_DIM, Z_DIM) and y_logvars.shape == (Y_DIM, Z_DIM)
    # bf16 matmul operands vs f32 reference -> loose-but-meaningful tolerance
    assert jnp.allclose(y_mus, mus_ref, atol=2e-2), float(jnp.max(jnp.abs(y_mus - mus_ref)))
    assert jnp.allclose(y_logvars, lvs_ref, atol=2e-2), float(jnp.max(jnp.abs(y_logvars - lvs_ref)))

    # -- tensor prior generator: parameter passthrough (no compute) ----------
    tensor_params = init_prior_tensor_params(k_tensor)
    t_mus, t_lvs = prior_forward(x_dummy, prior_generator="tensor",
                                 tensor_params=tensor_params)
    jax.block_until_ready((t_mus, t_lvs))
    assert t_mus.shape == (Y_DIM, Z_DIM) and t_lvs.shape == (Y_DIM, Z_DIM)
    assert jnp.array_equal(t_mus, tensor_params[0])
    assert jnp.array_equal(t_lvs, tensor_params[1])

    print("KERNEL_OK")
</pallas_src>

<mosaic_0001>
module attributes {stable_mosaic.version = 11 : i64} {
  func.func @_prior_fc_kernel(%arg0: memref<8x8xbf16, #tpu.memory_space<vmem>>, %arg1: memref<8x128xbf16, #tpu.memory_space<vmem>>, %arg2: memref<1x128xf32, #tpu.memory_space<vmem>>, %arg3: memref<128x128xbf16, #tpu.memory_space<vmem>>, %arg4: memref<1x128xf32, #tpu.memory_space<vmem>>, %arg5: memref<8x128xf32, #tpu.memory_space<vmem>>) attributes {dimension_semantics = [], scalar_prefetch = 0 : i64, scratch_operands = 0 : i64, tpu.core_type = #tpu.core_type<tc>} {
    %c0 = arith.constant 0 : index
    %c0_0 = arith.constant 0 : index
    %0 = vector.load %arg0[%c0, %c0_0] : memref<8x8xbf16, #tpu.memory_space<vmem>>, vector<8x8xbf16>
    %c0_1 = arith.constant 0 : index
    %c0_2 = arith.constant 0 : index
    %1 = vector.load %arg1[%c0_1, %c0_2] : memref<8x128xbf16, #tpu.memory_space<vmem>>, vector<8x128xbf16>
    %cst = arith.constant dense<0.000000e+00> : vector<8x128xf32>
    %2 = tpu.matmul %0, %1, %cst {dimension_numbers = #tpu.dot_dimension_numbers<[1], [0], [0], [1], [0, 0, 1, 1], [], []>} : vector<8x8xbf16>, vector<8x128xbf16>, vector<8x128xf32> -> vector<8x128xf32>
    %c0_3 = arith.constant 0 : index
    %c0_4 = arith.constant 0 : index
    %3 = vector.load %arg2[%c0_3, %c0_4] : memref<1x128xf32, #tpu.memory_space<vmem>>, vector<1x128xf32>
    %4 = vector.broadcast %3 : vector<1x128xf32> to vector<8x128xf32>
    %5 = arith.addf %2, %4 : vector<8x128xf32>
    %cst_5 = arith.constant 0.000000e+00 : f32
    %6 = vector.broadcast %cst_5 : f32 to vector<8x128xf32>
    %7 = arith.maximumf %5, %6 : vector<8x128xf32>
    %8 = arith.truncf %7 : vector<8x128xf32> to vector<8x128xbf16>
    %c0_6 = arith.constant 0 : index
    %c0_7 = arith.constant 0 : index
    %9 = vector.load %arg3[%c0_6, %c0_7] : memref<128x128xbf16, #tpu.memory_space<vmem>>, vector<128x128xbf16>
    %cst_8 = arith.constant dense<0.000000e+00> : vector<8x128xf32>
    %10 = tpu.matmul %8, %9, %cst_8 {dimension_numbers = #tpu.dot_dimension_numbers<[1], [0], [0], [1], [0, 0, 1, 1], [], []>} : vector<8x128xbf16>, vector<128x128xbf16>, vector<8x128xf32> -> vector<8x128xf32>
    %c0_9 = arith.constant 0 : index
    %c0_10 = arith.constant 0 : index
    %11 = vector.load %arg4[%c0_9, %c0_10] : memref<1x128xf32, #tpu.memory_space<vmem>>, vector<1x128xf32>
    %12 = vector.broadcast %11 : vector<1x128xf32> to vector<8x128xf32>
    %13 = arith.addf %10, %12 : vector<8x128xf32>
    %c0_11 = arith.constant 0 : index
    %c0_12 = arith.constant 0 : index
    %14 = vector.load %arg5[%c0_11, %c0_12] : memref<8x128xf32, #tpu.memory_space<vmem>>, vector<8x128xf32>
    tpu.vector_store %arg5[%c0_11, %c0_12], %13 {strides = array<i32>} : memref<8x128xf32, #tpu.memory_space<vmem>>, vector<8x128xf32>,
    return
  }
}

</mosaic_0001>

<llo_original>
// kernel: tpu_custom_call.1
$region0: #{tpu_custom_call.1}
  #allocation0 [shape = 'u32[]', space=smem, size = 0x4, offset = 0x4, fixed_abs, tag = 'smem constant byte address 0x4 - core index']
  #allocation1 [shape = 'u32[144,128]{1,0:T(1,128)}', space=vmem, size = 0x12000, scoped, tag = 'internal scratch']
  %s0 = inlined_call_operand.hbm [shape: bf16[8,8], index: 0, kind: input, shape index: {}]
  %s1 = inlined_call_operand.hbm [shape: bf16[8,128], index: 1, kind: input, shape index: {}]
  %s2 = inlined_call_operand.vmem [shape: f32[1,128], index: 2, kind: input, shape index: {}]
  %s3 = inlined_call_operand.hbm [shape: bf16[128,128], index: 3, kind: input, shape index: {}]
  %s4 = inlined_call_operand.vmem [shape: f32[1,128], index: 4, kind: input, shape index: {}]
  %s5 = inlined_call_operand.hbm [shape: f32[8,128], index: 5, kind: output, shape index: {}]
  %s6 = sld [smem:[#allocation0]]
  $region42: #{tpu_custom_call.1} parent=0
    _
  %s8 = ssub.s32 1, %s6
  %s9 = scalar_select 0, %s8, %s6
  $region1: #{tpu_custom_call.1} parent=0
    #allocation2 [shape = 'u8[2048]{0}', space=vmem, size = 0x800, scoped, tag = 'input window, operand 0, single buffered']
    #allocation3 [shape = 's32[1]{0}', space=sflag, size = 0x4, scoped, tag = 'scoped memory for tpu_custom_call.1']
    #allocation4 [shape = 's32[1]{0}', space=sflag, size = 0x4, scoped, tag = 'scoped memory for tpu_custom_call.1']
    #allocation5 [shape = 'u8[2048]{0}', space=vmem, size = 0x800, scoped, tag = 'input window, operand 1, single buffered']
    #allocation6 [shape = 's32[1]{0}', space=sflag, size = 0x4, scoped, tag = 'scoped memory for tpu_custom_call.1']
    #allocation7 [shape = 'u8[32768]{0}', space=vmem, size = 0x8000, scoped, tag = 'input window, operand 3, single buffered']
    #allocation8 [shape = 'u8[4096]{0}', space=vmem, size = 0x1000, scoped, tag = 'output window, operand 0, single buffered']
    %10 = vsyncpa [#allocation3], 0
    %11 = vsyncpa [#allocation6], 0
    %12 = vsyncpa [#allocation4], 0
    // Predicated region
    $region2: #{tpu_custom_call.1} parent=1 // pred_check
      _
    $region3: #{tpu_custom_call.1} parent=1 // pred_check_branch
      %14 = sbr.rel (0) target = $region5
    $region4: #{tpu_custom_call.1} parent=1 // pred_region
      %s16 = ssub.s32 64, 64
      %17 = vsyncadd [#allocation3], %s16
      %s19 = sshll.u32 [#allocation2], 4
      %s20 = int_to_ptr.vmem [resolvable:$true] %s19
      %22 = dma.hbm_to_vmem [thread:$0]  %s0, 64, %s20, [#allocation3]
    $region5: #{tpu_custom_call.1} parent=1 // pred_fallthru
      _
    // Predicated region
    $region6: #{tpu_custom_call.1} parent=1 // pred_check
      _
    $region7: #{tpu_custom_call.1} parent=1 // pred_check_branch
      %24 = sbr.rel (0) target = $region9
    $region8: #{tpu_custom_call.1} parent=1 // pred_region
      %s26 = ssub.s32 64, 64
      %27 = vsyncadd [#allocation6], %s26
      %s29 = sshll.u32 [#allocation5], 4
      %s30 = int_to_ptr.vmem [resolvable:$true] %s29
      %32 = dma.hbm_to_vmem [thread:$0]  %s1, 64, %s30, [#allocation6]
    $region9: #{tpu_custom_call.1} parent=1 // pred_fallthru
      _
    // Predicated region
    $region10: #{tpu_custom_call.1} parent=1 // pred_check
      _
    $region11: #{tpu_custom_call.1} parent=1 // pred_check_branch
      %34 = sbr.rel (0) target = $region13
    $region12: #{tpu_custom_call.1} parent=1 // pred_region
      _
    $region13: #{tpu_custom_call.1} parent=1 // pred_fallthru
      _
    // Predicated region
    $region14: #{tpu_custom_call.1} parent=1 // pred_check
      _
    $region15: #{tpu_custom_call.1} parent=1 // pred_check_branch
      %36 = sbr.rel (0) target = $region17
    $region16: #{tpu_custom_call.1} parent=1 // pred_region
      %s38 = ssub.s32 1024, 1024
      %39 = vsyncadd [#allocation6], %s38
      %s40 = sshll.u32 [#allocation7], 4
      %s41 = int_to_ptr.vmem [resolvable:$true] %s40
      %46 = dma.hbm_to_vmem [thread:$0]  %s3, 1024, %s41, [#allocation6], 64, 64, 4
    $region17: #{tpu_custom_call.1} parent=1 // pred_fallthru
      _
    // Predicated region
    $region18: #{tpu_custom_call.1} parent=1 // pred_check
      _
    $region19: #{tpu_custom_call.1} parent=1 // pred_check_branch
      %48 = sbr.rel (0) target = $region21
    $region20: #{tpu_custom_call.1} parent=1 // pred_region
      _
    $region21: #{tpu_custom_call.1} parent=1 // pred_fallthru
      _
    // Predicated region
    $region22: #{tpu_custom_call.1} parent=1 // pred_check
      _
    $region23: #{tpu_custom_call.1} parent=1 // pred_check_branch
      %50 = sbr.rel (0) target = $region25
    $region24: #{tpu_custom_call.1} parent=1 // pred_region
      %51 = dma.done [#allocation3], 64
    $region25: #{tpu_custom_call.1} parent=1 // pred_fallthru
      _
    // Predicated region
    $region26: #{tpu_custom_call.1} parent=1 // pred_check
      _
    $region27: #{tpu_custom_call.1} parent=1 // pred_check_branch
      %53 = sbr.rel (0) target = $region29
    $region28: #{tpu_custom_call.1} parent=1 // pred_region
      %54 = dma.done [#allocation6], 64
    $region29: #{tpu_custom_call.1} parent=1 // pred_fallthru
      _
    // Predicated region
    $region30: #{tpu_custom_call.1} parent=1 // pred_check
      _
    $region31: #{tpu_custom_call.1} parent=1 // pred_check_branch
      %56 = sbr.rel (0) target = $region33
    $region32: #{tpu_custom_call.1} parent=1 // pred_region
      %57 = dma.done [#allocation6], 1024
    $region33: #{tpu_custom_call.1} parent=1 // pred_fallthru
      _
    %v59 = vld [vmem:[#allocation2] sm:$0xf]
    %v60 = vld [vmem:[#allocation5] sm:$0xf]
    %v61 = vld [vmem:[%s2] sm:$0x1]
    %v63 = vlaneseq
    %v64 = vshrl.u32 %v63, 7
    %v65 = vsub.s32 0, %v64
    %v66 = vrot.slane %v61, %v65
    %vm68 = vcmask 64512
    %v70 = vsel %vm68, %v59, 0
    %vm72 = vcmask 1043456
    %v74 = vsel %vm72, %v60, 0
    %76 = vmatprep.subr.bf16.mxu0 0
    %77 = vmatpush1.bf16.msra.mxu0 0
    %78 = vmatprep.subr.bf16.mxu0 0
    %79 = vmatpush1.bf16.msra.mxu0 0
    %80 = vmatprep.subr.bf16.mxu0 0
    %81 = vmatpush1.bf16.msra.mxu0 0
    %82 = vmatprep.subr.bf16.mxu0 0
    %83 = vmatpush1.bf16.msra.mxu0 0
    %84 = vmatprep.subr.bf16.mxu0 0
    %85 = vmatpush1.bf16.msra.mxu0 0
    %86 = vmatprep.subr.bf16.mxu0 0
    %87 = vmatpush1.bf16.msra.mxu0 0
    %88 = vmatprep.subr.bf16.mxu0 0
    %89 = vmatpush1.bf16.msra.mxu0 0
    %90 = vmatprep.subr.bf16.mxu0 0
    %91 = vmatpush1.bf16.msra.mxu0 %v74
    %92 = vmatprep.subr.bf16.mxu0 0
    %93 = vmatpush2.bf16.msra.mxu0 0
    %94 = vmatprep.subr.bf16.mxu0 0
    %95 = vmatpush2.bf16.msra.mxu0 0
    %96 = vmatprep.subr.bf16.mxu0 0
    %97 = vmatpush2.bf16.msra.mxu0 0
    %98 = vmatprep.subr.bf16.mxu0 0
    %99 = vmatpush2.bf16.msra.mxu0 0
    %100 = vmatprep.subr.bf16.mxu0 0
    %101 = vmatpush2.bf16.msra.mxu0 0
    %102 = vmatprep.subr.bf16.mxu0 0
    %103 = vmatpush2.bf16.msra.mxu0 0
    %104 = vmatprep.subr.bf16.mxu0 0
    %105 = vmatpush2.bf16.msra.mxu0 0
    %106 = vmatprep.subr.bf16.mxu0 0
    %107 = vmatpush2.bf16.msra.mxu0 0
    %108 = vmatprep.mubr.bf16.mxu0 0
    %109 = vmatmul.mubr.bf16.gmra.mxu0 %v70
    %v110 = vpop.f32.mrf.mxu0
    %v111 = vadd.f32 %v66, %v110
    %v112 = vpop.f32.mrf.mxu0
    %v113 = vpop.f32.mrf.mxu0
    %v114 = vpop.f32.mrf.mxu0
    %115 = vdwg.mxu0
    %v116 = vmax.f32 %v111, 0.0
    %v117 = vpack.c.bf16 %v116, %v116
    %v118 = vld [vmem:[#allocation7] sm:$0xf]
    %v119 = vld [vmem:[#allocation7 + $0x4] sm:$0xf]
    %v120 = vld [vmem:[#allocation7 + $0x8] sm:$0xf]
    %v121 = vld [vmem:[#allocation7 + $0xc] sm:$0xf]
    %v122 = vld [vmem:[#allocation7 + $0x10] sm:$0xf]
    %v123 = vld [vmem:[#allocation7 + $0x14] sm:$0xf]
    %v124 = vld [vmem:[#allocation7 + $0x18] sm:$0xf]
    %v125 = vld [vmem:[#allocation7 + $0x1c] sm:$0xf]
    %v126 = vld [vmem:[#allocation7 + $0x20] sm:$0xf]
    %v127 = vld [vmem:[#allocation7 + $0x24] sm:$0xf]
    %v128 = vld [vmem:[#allocation7 + $0x28] sm:$0xf]
    %v129 = vld [vmem:[#allocation7 + $0x2c] sm:$0xf]
    %v130 = vld [vmem:[#allocation7 + $0x30] sm:$0xf]
    %v131 = vld [vmem:[#allocation7 + $0x34] sm:$0xf]
    %v132 = vld [vmem:[#allocation7 + $0x38] sm:$0xf]
    %v133 = vld [vmem:[#allocation7 + $0x3c] sm:$0xf]
    %v134 = vld [vmem:[%s4] sm:$0x1]
    %v136 = vlaneseq
    %v137 = vshrl.u32 %v136, 7
    %v138 = vsub.s32 0, %v137
    %v139 = vrot.slane %v134, %v138
    %v157 = vunpack.c.l.b16 %v118
    %v158 = vunpack.c.l.b16 %v119
    %v159 = vunpack.c.l.b16 %v120
    %v160 = vunpack.c.l.b16 %v121
    %v161 = vunpack.c.l.b16 %v122
    %v162 = vunpack.c.l.b16 %v123
    %v163 = vunpack.c.l.b16 %v124
    %v164 = vunpack.c.l.b16 %v125
    %v165 = vunpack.c.l.b16 %v126
    %v166 = vunpack.c.l.b16 %v127
    %v167 = vunpack.c.l.b16 %v128
    %v168 = vunpack.c.l.b16 %v129
    %v169 = vunpack.c.l.b16 %v130
    %v170 = vunpack.c.l.b16 %v131
    %v171 = vunpack.c.l.b16 %v132
    %v172 = vunpack.c.l.b16 %v133
    %v173 = vpack.c.b16 %v158, %v157
    %v174 = vpack.c.b16 %v160, %v159
    %v175 = vpack.c.b16 %v162, %v161
    %v176 = vpack.c.b16 %v164, %v163
    %v177 = vpack.c.b16 %v166, %v165
    %v178 = vpack.c.b16 %v168, %v167
    %v179 = vpack.c.b16 %v170, %v169
    %v180 = vpack.c.b16 %v172, %v171
    %189 = vmatprep.subr.bf16.mxu0 0
    %190 = vmatpush1.bf16.msra.mxu0 %v180
    %191 = vmatprep.subr.bf16.mxu0 0
    %192 = vmatpush1.bf16.msra.mxu0 %v179
    %193 = vmatprep.subr.bf16.mxu0 0
    %194 = vmatpush1.bf16.msra.mxu0 %v178
    %195 = vmatprep.subr.bf16.mxu0 0
    %196 = vmatpush1.bf16.msra.mxu0 %v177
    %197 = vmatprep.subr.bf16.mxu0 0
    %198 = vmatpush1.bf16.msra.mxu0 %v176
    %199 = vmatprep.subr.bf16.mxu0 0
    %200 = vmatpush1.bf16.msra.mxu0 %v175
    %201 = vmatprep.subr.bf16.mxu0 0
    %202 = vmatpush1.bf16.msra.mxu0 %v174
    %203 = vmatprep.subr.bf16.mxu0 0
    %204 = vmatpush1.bf16.msra.mxu0 %v173
    %205 = vmatprep.subr.bf16.mxu0 0
    %206 = vmatpush2.bf16.msra.mxu0 0
    %207 = vmatprep.subr.bf16.mxu0 0
    %208 = vmatpush2.bf16.msra.mxu0 0
    %209 = vmatprep.subr.bf16.mxu0 0
    %210 = vmatpush2.bf16.msra.mxu0 0
    %211 = vmatprep.subr.bf16.mxu0 0
    %212 = vmatpush2.bf16.msra.mxu0 0
    %213 = vmatprep.subr.bf16.mxu0 0
    %214 = vmatpush2.bf16.msra.mxu0 0
    %215 = vmatprep.subr.bf16.mxu0 0
    %216 = vmatpush2.bf16.msra.mxu0 0
    %217 = vmatprep.subr.bf16.mxu0 0
    %218 = vmatpush2.bf16.msra.mxu0 0
    %219 = vmatprep.subr.bf16.mxu0 0
    %220 = vmatpush2.bf16.msra.mxu0 0
    %221 = vmatprep.mubr.bf16.mxu0 0
    %222 = vmatmul.mubr.bf16.gmra.mxu0 %v117
    %v223 = vpop.f32.mrf.mxu0
    %v224 = vadd.f32 %v139, %v223
    %v225 = vpop.f32.mrf.mxu0
    %v226 = vpop.f32.mrf.mxu0
    %v227 = vpop.f32.mrf.mxu0
    %228 = vdwg.mxu0
    %229 = vst [vmem:[#allocation8] sm:$0xff] %v224
    // Predicated region
    $region34: #{tpu_custom_call.1} parent=1 // pred_check
      _
    $region35: #{tpu_custom_call.1} parent=1 // pred_check_branch
      %231 = sbr.rel (0) target = $region37
    $region36: #{tpu_custom_call.1} parent=1 // pred_region
      %s233 = ssub.s32 128, 128
      %234 = vsyncadd [#allocation4], %s233
      %s236 = sshll.u32 [#allocation8], 4
      %s237 = int_to_ptr.vmem [resolvable:$true] %s236
      %239 = dma.vmem_to_hbm [thread:$0]  %s237, 128, %s5, [#allocation4]
    $region37: #{tpu_custom_call.1} parent=1 // pred_fallthru
      _
    // Predicated region
    $region38: #{tpu_custom_call.1} parent=1 // pred_check
      _
    $region39: #{tpu_custom_call.1} parent=1 // pred_check_branch
      %241 = sbr.rel (0) target = $region41
    $region40: #{tpu_custom_call.1} parent=1 // pred_region
      %242 = dma.done [#allocation4], 128
    $region41: #{tpu_custom_call.1} parent=1 // pred_fallthru
      _
    %243 = vsyncpa [#allocation3], 1
    %244 = vsyncpa [#allocation6], 1
    %245 = vsyncpa [#allocation4], 1

</llo_original>
